<compile_context>
chip_gen: v7x
topology: tpu7x:2x2x1
jax: 0.10.0
libtpu: 0.0.40
codegen_flags: <defaults>
</compile_context>

<pallas_src>
import jax
import jax.numpy as jnp
from jax import lax
from jax.experimental import pallas as pl
from jax.experimental.pallas import tpu as pltpu

BATCH = 8              # batch_size of the nn.Module
DIM = 32               # embedding dimension
TEMPERATURE = 0.5      # buffer 'temperature'
INV_T = 1.0 / TEMPERATURE


def _ntxent_kernel(ei_ref, ej_ref, out_ref, z_ref):
    # ei_ref / ej_ref: (B, D) raw embeddings, z_ref: (2B, D) VMEM scratch
    xi = ei_ref[...].astype(jnp.float32)
    xj = ej_ref[...].astype(jnp.float32)

    # F.normalize(dim=1): x / max(||x||_2, 1e-12) == x * rsqrt(max(sum(x^2), 1e-24))
    zi = xi * lax.rsqrt(jnp.maximum(jnp.sum(xi * xi, axis=1, keepdims=True), 1e-24))
    zj = xj * lax.rsqrt(jnp.maximum(jnp.sum(xj * xj, axis=1, keepdims=True), 1e-24))

    # "concat" in-kernel: write both normalized blocks into the VMEM scratch.
    b = BATCH
    z_ref[0:b, :] = zi
    z_ref[b:2 * b, :] = zj
    z = z_ref[...]                                              # (2B, D)

    # cosine-similarity matrix z @ z.T without materializing z.T:
    sim = lax.dot_general(
        z, z,
        dimension_numbers=(((1,), (1,)), ((), ())),
        preferred_element_type=jnp.float32,
    )                                                           # (2B, 2B)

    n2 = sim.shape[0]
    row = lax.broadcasted_iota(jnp.int32, sim.shape, 0)
    col = lax.broadcasted_iota(jnp.int32, sim.shape, 1)
    neg_mask = (row != col).astype(jnp.float32)                 # ~eye(2B), in-kernel

    exp_sim = jnp.exp(sim * INV_T)
    denom = jnp.sum(neg_mask * exp_sim, axis=1, keepdims=True)  # (2B, 1)

    # positives: sim[r, (r+B) % 2B]; rows r and r+B both equal zi[r].zj[r],
    # so the summed positive term is simply 2 * sum(zi * zj).
    pos_sum = 2.0 * jnp.sum(zi * zj)

    # loss = mean_r [ log(denom_r) - pos_r / T ]
    out_ref[0, 0] = (jnp.sum(jnp.log(denom)) - INV_T * pos_sum) / n2


def contrastive_loss(emb_i, emb_j):
    out = pl.pallas_call(
        _ntxent_kernel,
        out_shape=jax.ShapeDtypeStruct((1, 1), jnp.float32),
        in_specs=[
            pl.BlockSpec(memory_space=pltpu.MemorySpace.VMEM),
            pl.BlockSpec(memory_space=pltpu.MemorySpace.VMEM),
        ],
        out_specs=pl.BlockSpec(memory_space=pltpu.MemorySpace.SMEM),
        scratch_shapes=[pltpu.VMEM((2 * BATCH, DIM), jnp.float32)],
    )(emb_i.astype(jnp.float32), emb_j.astype(jnp.float32))
    return out[0, 0]


if __name__ == "__main__":
    key = jax.random.PRNGKey(0)
    ki, kj = jax.random.split(key)
    emb_i = jax.random.normal(ki, (BATCH, DIM), jnp.float32)
    emb_j = jax.random.normal(kj, (BATCH, DIM), jnp.float32)

    loss = jax.block_until_ready(contrastive_loss(emb_i, emb_j))

    # pure-JAX reference (mirrors the PyTorch forward exactly)
    zi = emb_i / jnp.maximum(jnp.linalg.norm(emb_i, axis=1, keepdims=True), 1e-12)
    zj = emb_j / jnp.maximum(jnp.linalg.norm(emb_j, axis=1, keepdims=True), 1e-12)
    reps = jnp.concatenate([zi, zj], axis=0)
    sim = reps @ reps.T
    positives = jnp.concatenate(
        [jnp.diag(sim, BATCH), jnp.diag(sim, -BATCH)], axis=0)
    negatives_mask = 1.0 - jnp.eye(2 * BATCH, dtype=jnp.float32)
    denom = jnp.sum(negatives_mask * jnp.exp(sim / TEMPERATURE), axis=1)
    ref = jnp.sum(-(positives / TEMPERATURE - jnp.log(denom))) / (2 * BATCH)

    assert jnp.allclose(loss, ref, atol=1e-4, rtol=1e-4), (loss, ref)
    print("KERNEL_OK")
</pallas_src>

<mosaic_0001>
module attributes {stable_mosaic.version = 11 : i64} {
  func.func @_ntxent_kernel(%arg0: memref<8x32xf32, #tpu.memory_space<vmem>>, %arg1: memref<8x32xf32, #tpu.memory_space<vmem>>, %arg2: memref<1x1xf32, #tpu.memory_space<smem>>, %arg3: memref<16x32xf32, #tpu.memory_space<vmem>>) attributes {dimension_semantics = [], scalar_prefetch = 0 : i64, scratch_operands = 1 : i64, tpu.core_type = #tpu.core_type<tc>} {
    %c0 = arith.constant 0 : index
    %c0_0 = arith.constant 0 : index
    %0 = vector.load %arg0[%c0, %c0_0] : memref<8x32xf32, #tpu.memory_space<vmem>>, vector<8x32xf32>
    %c0_1 = arith.constant 0 : index
    %c0_2 = arith.constant 0 : index
    %1 = vector.load %arg1[%c0_1, %c0_2] : memref<8x32xf32, #tpu.memory_space<vmem>>, vector<8x32xf32>
    %2 = arith.mulf %0, %0 : vector<8x32xf32>
    %cst = arith.constant dense<0.000000e+00> : vector<8xf32>
    %3 = vector.multi_reduction <add>, %2, %cst [1] : vector<8x32xf32> to vector<8xf32>
    %4 = vector.shape_cast %3 : vector<8xf32> to vector<8x1xf32>
    %cst_3 = arith.constant 1.000000e-24 : f32
    %5 = vector.broadcast %cst_3 : f32 to vector<8x1xf32>
    %6 = arith.maximumf %4, %5 : vector<8x1xf32>
    %7 = math.rsqrt %6 : vector<8x1xf32>
    %8 = vector.broadcast %7 : vector<8x1xf32> to vector<8x32xf32>
    %9 = arith.mulf %0, %8 : vector<8x32xf32>
    %10 = arith.mulf %1, %1 : vector<8x32xf32>
    %cst_4 = arith.constant dense<0.000000e+00> : vector<8xf32>
    %11 = vector.multi_reduction <add>, %10, %cst_4 [1] : vector<8x32xf32> to vector<8xf32>
    %12 = vector.shape_cast %11 : vector<8xf32> to vector<8x1xf32>
    %cst_5 = arith.constant 1.000000e-24 : f32
    %13 = vector.broadcast %cst_5 : f32 to vector<8x1xf32>
    %14 = arith.maximumf %12, %13 : vector<8x1xf32>
    %15 = math.rsqrt %14 : vector<8x1xf32>
    %16 = vector.broadcast %15 : vector<8x1xf32> to vector<8x32xf32>
    %17 = arith.mulf %1, %16 : vector<8x32xf32>
    %c0_6 = arith.constant 0 : index
    %c0_7 = arith.constant 0 : index
    %18 = vector.load %arg3[%c0_6, %c0_7] : memref<16x32xf32, #tpu.memory_space<vmem>>, vector<8x32xf32>
    tpu.vector_store %arg3[%c0_6, %c0_7], %9 {strides = array<i32>} : memref<16x32xf32, #tpu.memory_space<vmem>>, vector<8x32xf32>,
    %c8 = arith.constant 8 : index
    %c0_8 = arith.constant 0 : index
    %19 = vector.load %arg3[%c8, %c0_8] : memref<16x32xf32, #tpu.memory_space<vmem>>, vector<8x32xf32>
    tpu.vector_store %arg3[%c8, %c0_8], %17 {strides = array<i32>} : memref<16x32xf32, #tpu.memory_space<vmem>>, vector<8x32xf32>,
    %c0_9 = arith.constant 0 : index
    %c0_10 = arith.constant 0 : index
    %20 = vector.load %arg3[%c0_9, %c0_10] : memref<16x32xf32, #tpu.memory_space<vmem>>, vector<16x32xf32>
    %cst_11 = arith.constant dense<0.000000e+00> : vector<16x16xf32>
    %21 = tpu.matmul %20, %20, %cst_11 {dimension_numbers = #tpu.dot_dimension_numbers<[1], [1], [0], [0], [0, 0, 1, 0], [], []>} : vector<16x32xf32>, vector<16x32xf32>, vector<16x16xf32> -> vector<16x16xf32>
    %22 = tpu.iota {dimensions = array<i32: 0>} : vector<16x16xi32>
    %23 = tpu.iota {dimensions = array<i32: 1>} : vector<16x16xi32>
    %24 = arith.cmpi ne, %22, %23 : vector<16x16xi32>
    %25 = arith.extui %24 : vector<16x16xi1> to vector<16x16xi32>
    %26 = arith.sitofp %25 : vector<16x16xi32> to vector<16x16xf32>
    %cst_12 = arith.constant 2.000000e+00 : f32
    %27 = vector.broadcast %cst_12 : f32 to vector<16x16xf32>
    %28 = arith.mulf %21, %27 : vector<16x16xf32>
    %29 = math.exp %28 : vector<16x16xf32>
    %30 = arith.mulf %26, %29 : vector<16x16xf32>
    %cst_13 = arith.constant dense<0.000000e+00> : vector<16xf32>
    %31 = vector.multi_reduction <add>, %30, %cst_13 [1] : vector<16x16xf32> to vector<16xf32>
    %32 = vector.shape_cast %31 : vector<16xf32> to vector<16x1xf32>
    %33 = arith.mulf %9, %17 : vector<8x32xf32>
    %34 = vector.shape_cast %33 : vector<8x32xf32> to vector<1x8x32xf32>
    %cst_14 = arith.constant dense<0.000000e+00> : vector<1xf32>
    %35 = vector.multi_reduction <add>, %34, %cst_14 [1, 2] : vector<1x8x32xf32> to vector<1xf32>
    %36 = vector.shape_cast %35 : vector<1xf32> to vector<1x1x1xf32>
    %37 = vector.extract %36[0, 0, 0] : f32 from vector<1x1x1xf32>
    %cst_15 = arith.constant 2.000000e+00 : f32
    %38 = arith.mulf %cst_15, %37 : f32
    %39 = math.log %32 : vector<16x1xf32>
    %40 = vector.shape_cast %39 : vector<16x1xf32> to vector<1x16x1xf32>
    %cst_16 = arith.constant dense<0.000000e+00> : vector<1xf32>
    %41 = vector.multi_reduction <add>, %40, %cst_16 [1, 2] : vector<1x16x1xf32> to vector<1xf32>
    %42 = vector.shape_cast %41 : vector<1xf32> to vector<1x1x1xf32>
    %43 = vector.extract %42[0, 0, 0] : f32 from vector<1x1x1xf32>
    %cst_17 = arith.constant 2.000000e+00 : f32
    %44 = arith.mulf %cst_17, %38 : f32
    %45 = arith.subf %43, %44 : f32
    %cst_18 = arith.constant 1.600000e+01 : f32
    %46 = arith.divf %45, %cst_18 : f32
    %c0_19 = arith.constant 0 : index
    %c0_20 = arith.constant 0 : index
    %47 = memref.load %arg2[%c0_19, %c0_20] : memref<1x1xf32, #tpu.memory_space<smem>>
    memref.store %46, %arg2[%c0_19, %c0_20] : memref<1x1xf32, #tpu.memory_space<smem>>
    return
  }
}

</mosaic_0001>

<llo_original>
// kernel: tpu_custom_call.1
$region0: #{tpu_custom_call.1}
  #allocation0 [shape = 'u32[]', space=smem, size = 0x4, offset = 0x4, fixed_abs, tag = 'smem constant byte address 0x4 - core index']
  #allocation1 [shape = 'u32[144,128]{1,0:T(1,128)}', space=vmem, size = 0x12000, scoped, tag = 'internal scratch']
  #allocation2 [shape = 'f32[16,32]{1,0:T(8,128)}', space=vmem, size = 0x2000, scoped, tag = 'scratch operand']
  %s0 = inlined_call_operand.hbm [shape: f32[8,32], index: 0, kind: input, shape index: {}]
  %s1 = inlined_call_operand.hbm [shape: f32[8,32], index: 1, kind: input, shape index: {}]
  %s2 = inlined_call_operand.hbm [shape: f32[1,1], index: 2, kind: output, shape index: {}]
  %s3 = sld [smem:[#allocation0]]
  $region26: #{tpu_custom_call.1} parent=0
    _
  %s5 = ssub.s32 1, %s3
  %s6 = scalar_select 0, %s5, %s3
  $region1: #{tpu_custom_call.1} parent=0
    #allocation3 [shape = 'u8[4096]{0}', space=vmem, size = 0x1000, scoped, tag = 'input window, operand 0, single buffered']
    #allocation4 [shape = 's32[1]{0}', space=sflag, size = 0x4, scoped, tag = 'scoped memory for tpu_custom_call.1']
    #allocation5 [shape = 's32[1]{0}', space=sflag, size = 0x4, scoped, tag = 'scoped memory for tpu_custom_call.1']
    #allocation6 [shape = 'u8[4096]{0}', space=vmem, size = 0x1000, scoped, tag = 'input window, operand 1, single buffered']
    #allocation7 [shape = 's32[1]{0}', space=sflag, size = 0x4, scoped, tag = 'scoped memory for tpu_custom_call.1']
    #allocation8 [shape = 'u8[512]{0}', space=smem, size = 0x200, scoped, tag = 'output window, operand 0, single buffered']
    %7 = vsyncpa [#allocation4], 0
    %8 = vsyncpa [#allocation7], 0
    %9 = vsyncpa [#allocation5], 0
    // Predicated region
    $region2: #{tpu_custom_call.1} parent=1 // pred_check
      _
    $region3: #{tpu_custom_call.1} parent=1 // pred_check_branch
      %11 = sbr.rel (0) target = $region5
    $region4: #{tpu_custom_call.1} parent=1 // pred_region
      %s13 = ssub.s32 128, 128
      %14 = vsyncadd [#allocation4], %s13
      %s16 = sshll.u32 [#allocation3], 4
      %s17 = int_to_ptr.vmem [resolvable:$true] %s16
      %19 = dma.hbm_to_vmem [thread:$0]  %s0, 128, %s17, [#allocation4]
    $region5: #{tpu_custom_call.1} parent=1 // pred_fallthru
      _
    // Predicated region
    $region6: #{tpu_custom_call.1} parent=1 // pred_check
      _
    $region7: #{tpu_custom_call.1} parent=1 // pred_check_branch
      %21 = sbr.rel (0) target = $region9
    $region8: #{tpu_custom_call.1} parent=1 // pred_region
      %s23 = ssub.s32 128, 128
      %24 = vsyncadd [#allocation7], %s23
      %s26 = sshll.u32 [#allocation6], 4
      %s27 = int_to_ptr.vmem [resolvable:$true] %s26
      %29 = dma.hbm_to_vmem [thread:$0]  %s1, 128, %s27, [#allocation7]
    $region9: #{tpu_custom_call.1} parent=1 // pred_fallthru
      _
    // Predicated region
    $region10: #{tpu_custom_call.1} parent=1 // pred_check
      _
    $region11: #{tpu_custom_call.1} parent=1 // pred_check_branch
      %31 = sbr.rel (0) target = $region13
    $region12: #{tpu_custom_call.1} parent=1 // pred_region
      %32 = dma.done [#allocation4], 128
    $region13: #{tpu_custom_call.1} parent=1 // pred_fallthru
      _
    // Predicated region
    $region14: #{tpu_custom_call.1} parent=1 // pred_check
      _
    $region15: #{tpu_custom_call.1} parent=1 // pred_check_branch
      %34 = sbr.rel (0) target = $region17
    $region16: #{tpu_custom_call.1} parent=1 // pred_region
      %35 = dma.done [#allocation7], 128
    $region17: #{tpu_custom_call.1} parent=1 // pred_fallthru
      _
    %v36 = vld [vmem:[#allocation3] sm:$0xff]
    %v37 = vld [vmem:[#allocation6] sm:$0xff]
    %v38 = vmul.f32 %v36, %v36
    %vm39 = vcmask 261120
    %v40 = vsel %vm39, %v38, 0.0
    %41 = vadd.xlane.f32.xlu0 %v40
    %v42 = vpop.xlane.xlu0 %41
    %v43 = vmax.f32 %v42, 1e-24
    %v44 = vrsqrt.pop %v43
    %v45 = vmul.f32 %v36, %v44
    %v46 = vmul.f32 %v37, %v37
    %v47 = vsel %vm39, %v46, 0.0
    %48 = vadd.xlane.f32.xlu0 %v47
    %v49 = vpop.xlane.xlu0 %48
    %v50 = vmax.f32 %v49, 1e-24
    %v51 = vrsqrt.pop %v50
    %v52 = vmul.f32 %v37, %v51
    %53 = vst.msk [vmem:[#allocation2] sm:$0xff] %vm39, %v45
    %54 = vst.msk [vmem:[#allocation2 + $0x8] sm:$0xff] %vm39, %v52
    %v55 = vld [vmem:[#allocation2] sm:$0xff]
    %v56 = vld [vmem:[#allocation2 + $0x8] sm:$0xff]
    %v58 = vsel %vm39, %v55, 0
    %v61 = vsel %vm39, %v56, 0
    %63 = vmatprep.subr.mxu0 0.0
    %64 = vmatpush1.xpose.msra.mxu0 %v58
    %65 = vmatprep.subr.mxu0 0.0
    %66 = vmatpush1.xpose.msra.mxu0 %v61
    %67 = vmatprep.subr.mxu0 0.0
    %68 = vmatpush1.xpose.msra.mxu0 0.0
    %69 = vmatprep.subr.mxu0 0.0
    %70 = vmatpush1.xpose.msra.mxu0 0.0
    %71 = vmatprep.subr.mxu0 0.0
    %72 = vmatpush1.xpose.msra.mxu0 0.0
    %73 = vmatprep.subr.mxu0 0.0
    %74 = vmatpush1.xpose.msra.mxu0 0.0
    %75 = vmatprep.subr.mxu0 0.0
    %76 = vmatpush1.xpose.msra.mxu0 0.0
    %77 = vmatprep.subr.mxu0 0.0
    %78 = vmatpush1.xpose.msra.mxu0 0.0
    %79 = vmatprep.subr.mxu0 0.0
    %80 = vmatpush1.xpose.msra.mxu0 0.0
    %81 = vmatprep.subr.mxu0 0.0
    %82 = vmatpush1.xpose.msra.mxu0 0.0
    %83 = vmatprep.subr.mxu0 0.0
    %84 = vmatpush1.xpose.msra.mxu0 0.0
    %85 = vmatprep.subr.mxu0 0.0
    %86 = vmatpush1.xpose.msra.mxu0 0.0
    %87 = vmatprep.subr.mxu0 0.0
    %88 = vmatpush1.xpose.msra.mxu0 0.0
    %89 = vmatprep.subr.mxu0 0.0
    %90 = vmatpush1.xpose.msra.mxu0 0.0
    %91 = vmatprep.subr.mxu0 0.0
    %92 = vmatpush1.xpose.msra.mxu0 0.0
    %93 = vmatprep.subr.mxu0 0.0
    %94 = vmatpush1.xpose.msra.mxu0 0.0
    %95 = vmatprep.subr.mxu0 0.0
    %96 = vmatpush1.xpose.msra.mxu0 0.0
    %97 = vmatprep.subr.mxu0 0.0
    %98 = vmatpush1.xpose.msra.mxu0 0.0
    %99 = vmatprep.subr.mxu0 0.0
    %100 = vmatpush1.xpose.msra.mxu0 0.0
    %101 = vmatprep.subr.mxu0 0.0
    %102 = vmatpush1.xpose.msra.mxu0 0.0
    %103 = vmatprep.subr.mxu0 0.0
    %104 = vmatpush1.xpose.msra.mxu0 0.0
    %105 = vmatprep.subr.mxu0 0.0
    %106 = vmatpush1.xpose.msra.mxu0 0.0
    %107 = vmatprep.subr.mxu0 0.0
    %108 = vmatpush1.xpose.msra.mxu0 0.0
    %109 = vmatprep.subr.mxu0 0.0
    %110 = vmatpush1.xpose.msra.mxu0 0.0
    %111 = vmatprep.subr.mxu0 0.0
    %112 = vmatpush1.xpose.msra.mxu0 0.0
    %113 = vmatprep.subr.mxu0 0.0
    %114 = vmatpush1.xpose.msra.mxu0 0.0
    %115 = vmatprep.subr.mxu0 0.0
    %116 = vmatpush1.xpose.msra.mxu0 0.0
    %117 = vmatprep.subr.mxu0 0.0
    %118 = vmatpush1.xpose.msra.mxu0 0.0
    %119 = vmatprep.subr.mxu0 0.0
    %120 = vmatpush1.xpose.msra.mxu0 0.0
    %121 = vmatprep.subr.mxu0 0.0
    %122 = vmatpush1.xpose.msra.mxu0 0.0
    %123 = vmatprep.subr.mxu0 0.0
    %124 = vmatpush1.xpose.msra.mxu0 0.0
    %125 = vmatprep.subr.mxu0 0.0
    %126 = vmatpush1.xpose.msra.mxu0 0.0
    %127 = vmatprep.mubr.f32.mxu0 0.0
    %128 = vmatmul.mubr.f32.gmra.mrb[0].mxu0 %v58
    %v129 = vpop.f32.mrb[0].mxu0
    %v130 = vadd.f32 0.0, %v129
    %v131 = vpop.f32.mrb[0].mxu0
    %132 = vmatprep.mubr.f32.mxu0 0.0
    %133 = vmatmul.mubr.f32.gmra.mrb[0].mxu0 %v61
    %v134 = vpop.f32.mrb[0].mxu0
    %v135 = vadd.f32 0.0, %v134
    %v136 = vpop.f32.mrb[0].mxu0
    %137 = vdwg.mxu0
    %v138 = vlaneseq
    %v139 = vshrl.u32 %v138, 7
    %v140 = vadd.s32 %v139, 8
    %v141 = vlaneseq
    %v142 = vand.u32 %v141, 127
    %vm143 = vcmp.ne.s32.totalorder %v139, %v142
    %vm144 = vcmp.ne.s32.totalorder %v140, %v142
    %v145 = vsel %vm143, 1, 0
    %v146 = vsel %vm144, 1, 0
    %v147 = vcvt.s32.f32 %v145
    %v148 = vcvt.s32.f32 %v146
    %v149 = vmul.f32 %v130, 2.0
    %v150 = vmul.f32 %v135, 2.0
    %v151 = vmul.f32 %v149, 1.442695
    %v152 = vpow.pop %v151
    %v153 = vmul.f32 %v150, 1.442695
    %v154 = vpow.pop %v153
    %v155 = vmul.f32 %v147, %v152
    %v156 = vmul.f32 %v148, %v154
    %vm157 = vcmask 130048
    %v158 = vsel %vm157, %v155, 0.0
    %159 = vadd.xlane.f32.xlu0 %v158
    %v160 = vpop.xlane.xlu0 %159
    %v161 = vsel %vm157, %v156, 0.0
    %162 = vadd.xlane.f32.xlu0 %v161
    %v163 = vpop.xlane.xlu0 %162
    %v164 = vmul.f32 %v45, %v52
    %v165 = vsel %vm39, %v164, 0.0
    %166 = vadd.xlane.f32.xlu0 %v165
    %v167 = vpop.xlane.xlu0 %166
    %v168 = vrot.slane %v167, 4
    %v169 = vadd.f32 %v167, %v168
    %v170 = vrot.slane %v169, 2
    %v171 = vadd.f32 %v169, %v170
    %v172 = vrot.slane %v171, 1
    %v173 = vadd.f32 %v171, %v172
    %s174 = vtos %v173
    %s175 = smul.f32 %s174, 2.0
    %v176 = vlog2.pop %v160
    %v177 = vmul.f32 %v176, 0.6931472
    %v178 = vlog2.pop %v163
    %v179 = vmul.f32 %v178, 0.6931472
    %vm180 = vcmask 7168
    %v181 = vsel %vm180, %v177, 0.0
    %v182 = vsel %vm180, %v179, 0.0
    %v183 = vadd.f32 %v181, %v182
    %184 = vadd.xlane.f32.xlu0 %v183
    %v185 = vpop.xlane.xlu0 %184
    %v186 = vrot.slane %v185, 4
    %v187 = vadd.f32 %v185, %v186
    %v188 = vrot.slane %v187, 2
    %v189 = vadd.f32 %v187, %v188
    %v190 = vrot.slane %v189, 1
    %v191 = vadd.f32 %v189, %v190
    %s192 = vtos %v191
    %s193 = smul.f32 %s175, 2.0
    %s194 = ssub.f32 %s192, %s193
    %v195 = vrcp.pop 16.0
    %s196 = vtos %v195
    %s197 = smul.f32 %s194, %s196
    %s198 = scalar_lea.smem [#allocation8], 0
    %199 = sst [smem:[%s198]] %s197
    // Predicated region
    $region18: #{tpu_custom_call.1} parent=1 // pred_check
      _
    $region19: #{tpu_custom_call.1} parent=1 // pred_check_branch
      %201 = sbr.rel (0) target = $region21
    $region20: #{tpu_custom_call.1} parent=1 // pred_region
      %s203 = ssub.s32 16, 16
      %204 = vsyncadd [#allocation5], %s203
      %207 = dma.smem_to_hbm [#allocation8], 16, %s2, [#allocation5]
    $region21: #{tpu_custom_call.1} parent=1 // pred_fallthru
      _
    // Predicated region
    $region22: #{tpu_custom_call.1} parent=1 // pred_check
      _
    $region23: #{tpu_custom_call.1} parent=1 // pred_check_branch
      %209 = sbr.rel (0) target = $region25
    $region24: #{tpu_custom_call.1} parent=1 // pred_region
      %210 = dma.done [#allocation5], 16
    $region25: #{tpu_custom_call.1} parent=1 // pred_fallthru
      _
    %211 = sfence
    %212 = vsyncpa [#allocation4], 1
    %213 = vsyncpa [#allocation7], 1
    %214 = vsyncpa [#allocation5], 1

</llo_original>
